<compile_context>
chip_gen: v7x
topology: tpu7x:2x2x1
jax: 0.10.0
libtpu: 0.0.40
codegen_flags: <defaults>
</compile_context>

<pallas_src>
import functools

import jax
import jax.numpy as jnp
from jax.experimental import pallas as pl
from jax.experimental.pallas import tpu as pltpu

HIDDEN = 256
SUBLANE = 16  # bf16-friendly sublane multiple for the batch tile


def _round_up(x, m):
    return (x + m - 1) // m * m


def _actor_kernel(action_dim,
                  state_ref,
                  w1_ref, b1_ref,
                  w2_ref, b2_ref,
                  wh_ref, bh_ref,
                  out_ref):
    # state is already bf16 (wrapper cast); accumulate in f32.
    x = state_ref[...]

    # fc layer 1: Linear(state_dim, 256) + ReLU
    h1 = jnp.dot(x, w1_ref[...], preferred_element_type=jnp.float32) + b1_ref[...]
    h1 = jnp.maximum(h1, 0.0)

    # fc layer 2: Linear(256, 256) + ReLU
    h2 = jnp.dot(h1.astype(jnp.bfloat16), w2_ref[...],
                 preferred_element_type=jnp.float32) + b2_ref[...]
    h2 = jnp.maximum(h2, 0.0)

    # Fused narrow head: columns [0, A) = mean, [A, 2A) = log_std.
    head = jnp.dot(h2.astype(jnp.bfloat16), wh_ref[...],
                   preferred_element_type=jnp.float32) + bh_ref[...]

    # (1, 2A) column mask, broadcast over the batch tile in the select.
    col = jax.lax.broadcasted_iota(jnp.int32, (1, 2 * action_dim), 1)
    is_std = col >= action_dim
    std_vals = jnp.exp(jnp.clip(head, -20.0, 2.0))        # EUP slot, ~free
    out_ref[...] = jnp.where(is_std, std_vals, head).astype(out_ref.dtype)


def actor_forward(state, params, *, tile_b=2048):
    """Pallas-backed Actor.forward: returns (mean, std)."""
    B, state_dim = state.shape
    action_dim = params["wm"].shape[1]
    out_w = 2 * action_dim

    # --- operand prep (wrapper-side, traced once under jit) ----------------
    w1 = params["w1"].astype(jnp.bfloat16)
    w2 = params["w2"].astype(jnp.bfloat16)
    b1 = params["b1"].astype(jnp.float32)
    b2 = params["b2"].astype(jnp.float32)
    # Fuse mean | log_std heads into one narrow (256, 2A) weight / (1, 2A) bias.
    wh = jnp.concatenate([params["wm"], params["ws"]], axis=1).astype(jnp.bfloat16)
    bh = jnp.concatenate([params["bm"], params["bs"]], axis=1).astype(jnp.float32)

    # --- balanced batch tiling ---------------------------------------------
    tile_b = max(_round_up(int(tile_b), SUBLANE), SUBLANE)
    n_tiles = max(pl.cdiv(B, tile_b), 1)
    if B >= 2 * SUBLANE:
        n_tiles = max(n_tiles, 2)        # keep both v7x TensorCores busy
    tb = _round_up(pl.cdiv(B, n_tiles), SUBLANE)
    b_pad = tb * n_tiles

    state_bf = state.astype(jnp.bfloat16)
    if b_pad != B:
        state_in = jnp.zeros((b_pad, state_dim), jnp.bfloat16).at[:B].set(state_bf)
    else:
        state_in = state_bf

    # --- cost estimate -------------------------------------------------------
    flops = 2 * b_pad * (state_dim * HIDDEN + HIDDEN * HIDDEN + HIDDEN * out_w)
    transcendentals = b_pad * out_w
    bytes_accessed = (
        b_pad * state_dim * 2                       # bf16 state in
        + w1.size * 2 + w2.size * 2 + wh.size * 2   # bf16 weights
        + b1.size * 4 + b2.size * 4 + bh.size * 4   # f32 biases
        + b_pad * out_w * 4                         # f32 narrow output
    )

    out = pl.pallas_call(
        functools.partial(_actor_kernel, action_dim),
        out_shape=jax.ShapeDtypeStruct((b_pad, out_w), jnp.float32),
        grid=(n_tiles,),
        in_specs=[
            pl.BlockSpec((tb, state_dim), lambda i: (i, 0)),        # state tile
            pl.BlockSpec((state_dim, HIDDEN), lambda i: (0, 0)),    # w1 (resident)
            pl.BlockSpec((1, HIDDEN), lambda i: (0, 0)),            # b1
            pl.BlockSpec((HIDDEN, HIDDEN), lambda i: (0, 0)),       # w2
            pl.BlockSpec((1, HIDDEN), lambda i: (0, 0)),            # b2
            pl.BlockSpec((HIDDEN, out_w), lambda i: (0, 0)),        # fused head w
            pl.BlockSpec((1, out_w), lambda i: (0, 0)),             # fused head b
        ],
        out_specs=pl.BlockSpec((tb, out_w), lambda i: (i, 0)),
        compiler_params=pltpu.CompilerParams(
            dimension_semantics=("parallel",),
            vmem_limit_bytes=32 * 1024 * 1024),
        cost_estimate=pl.CostEstimate(
            flops=flops,
            transcendentals=transcendentals,
            bytes_accessed=bytes_accessed),
    )(state_in, w1, b1, w2, b2, wh, bh)

    mean = out[:B, :action_dim]
    std = out[:B, action_dim:]
    return mean, std


def init_actor_params(key, state_dim, action_dim):
    """Deterministic synthetic init (PyTorch-Linear-like uniform fan-in scaling)."""
    def linear(k, fan_in, fan_out):
        k_w, k_b = jax.random.split(k)
        bound = 1.0 / jnp.sqrt(fan_in)
        w = jax.random.uniform(k_w, (fan_in, fan_out), jnp.float32, -bound, bound)
        b = jax.random.uniform(k_b, (1, fan_out), jnp.float32, -bound, bound)
        return w, b

    k1, k2, k3, k4 = jax.random.split(key, 4)
    w1, b1 = linear(k1, state_dim, HIDDEN)
    w2, b2 = linear(k2, HIDDEN, HIDDEN)
    wm, bm = linear(k3, HIDDEN, action_dim)
    ws, bs = linear(k4, HIDDEN, action_dim)
    return dict(w1=w1, b1=b1, w2=w2, b2=b2, wm=wm, bm=bm, ws=ws, bs=bs)


def _reference_forward_f32(state, p):
    """Pure-JAX f32 reference mirroring the PyTorch module semantics."""
    h = jnp.maximum(state @ p["w1"] + p["b1"], 0.0)
    h = jnp.maximum(h @ p["w2"] + p["b2"], 0.0)
    mean = h @ p["wm"] + p["bm"]
    log_std = jnp.clip(h @ p["ws"] + p["bs"], -20.0, 2.0)
    return mean, jnp.exp(log_std)


def _reference_forward_bf16(state, p):
    """Reference with the same bf16-operand / f32-accumulate casts as the kernel."""
    bf = jnp.bfloat16
    h = jnp.maximum(
        jnp.dot(state.astype(bf), p["w1"].astype(bf),
                preferred_element_type=jnp.float32) + p["b1"], 0.0)
    h = jnp.maximum(
        jnp.dot(h.astype(bf), p["w2"].astype(bf),
                preferred_element_type=jnp.float32) + p["b2"], 0.0)
    mean = jnp.dot(h.astype(bf), p["wm"].astype(bf),
                   preferred_element_type=jnp.float32) + p["bm"]
    log_std = jnp.clip(
        jnp.dot(h.astype(bf), p["ws"].astype(bf),
                preferred_element_type=jnp.float32) + p["bs"], -20.0, 2.0)
    return mean, jnp.exp(log_std)


if __name__ == "__main__":
    state_dim = 16
    action_dim = 4
    batch = 2

    key = jax.random.PRNGKey(0)
    k_params, k_state = jax.random.split(key)

    params = init_actor_params(k_params, state_dim, action_dim)
    state = jax.random.normal(k_state, (batch, state_dim), jnp.float32)

    mean, std = actor_forward(state, params)
    jax.block_until_ready((mean, std))

    assert mean.shape == (batch, action_dim) and std.shape == (batch, action_dim)

    # Tight check vs a reference using identical bf16/f32 casting.
    ref_mean_bf, ref_std_bf = _reference_forward_bf16(state, params)
    assert jnp.allclose(mean, ref_mean_bf, atol=1e-2, rtol=1e-2)
    assert jnp.allclose(std, ref_std_bf, atol=1e-2, rtol=1e-2)

    # Looser check vs the pure-f32 PyTorch-equivalent semantics.
    ref_mean, ref_std = _reference_forward_f32(state, params)
    assert jnp.allclose(mean, ref_mean, atol=5e-2, rtol=5e-2)
    assert jnp.allclose(std, ref_std, atol=5e-2, rtol=5e-2)
    assert bool(jnp.all(std > 0.0))

    print("KERNEL_OK")
</pallas_src>

<mosaic_0001>
module attributes {stable_mosaic.version = 11 : i64} {
  func.func @_actor_kernel(%arg0: i32, %arg1: memref<16x16xbf16, #tpu.memory_space<vmem>>, %arg2: memref<16x256xbf16, #tpu.memory_space<vmem>>, %arg3: memref<1x256xf32, #tpu.memory_space<vmem>>, %arg4: memref<256x256xbf16, #tpu.memory_space<vmem>>, %arg5: memref<1x256xf32, #tpu.memory_space<vmem>>, %arg6: memref<256x8xbf16, #tpu.memory_space<vmem>>, %arg7: memref<1x8xf32, #tpu.memory_space<vmem>>, %arg8: memref<16x8xf32, #tpu.memory_space<vmem>>) attributes {dimension_semantics = [#tpu.dimension_semantics<parallel>], iteration_bounds = array<i64: 1>, scalar_prefetch = 0 : i64, scratch_operands = 0 : i64, tpu.core_type = #tpu.core_type<tc>, window_params = [{transform_indices = @transform_0, window_bounds = array<i64: 16, 16>}, {pipeline_mode = #tpu.pipeline_mode<synchronous>, transform_indices = @transform_1, window_bounds = array<i64: 16, 256>}, {pipeline_mode = #tpu.pipeline_mode<synchronous>, transform_indices = @transform_2, window_bounds = array<i64: 1, 256>}, {pipeline_mode = #tpu.pipeline_mode<synchronous>, transform_indices = @transform_3, window_bounds = array<i64: 256, 256>}, {pipeline_mode = #tpu.pipeline_mode<synchronous>, transform_indices = @transform_4, window_bounds = array<i64: 1, 256>}, {pipeline_mode = #tpu.pipeline_mode<synchronous>, transform_indices = @transform_5, window_bounds = array<i64: 256, 8>}, {pipeline_mode = #tpu.pipeline_mode<synchronous>, transform_indices = @transform_6, window_bounds = array<i64: 1, 8>}, {transform_indices = @transform_7, window_bounds = array<i64: 16, 8>}]} {
    %c0 = arith.constant 0 : index
    %c0_0 = arith.constant 0 : index
    %0 = vector.load %arg1[%c0, %c0_0] : memref<16x16xbf16, #tpu.memory_space<vmem>>, vector<16x16xbf16>
    %c0_1 = arith.constant 0 : index
    %c0_2 = arith.constant 0 : index
    %1 = vector.load %arg2[%c0_1, %c0_2] : memref<16x256xbf16, #tpu.memory_space<vmem>>, vector<16x256xbf16>
    %cst = arith.constant dense<0.000000e+00> : vector<16x256xf32>
    %2 = tpu.matmul %0, %1, %cst {dimension_numbers = #tpu.dot_dimension_numbers<[1], [0], [0], [1], [0, 0, 1, 1], [], []>} : vector<16x16xbf16>, vector<16x256xbf16>, vector<16x256xf32> -> vector<16x256xf32>
    %c0_3 = arith.constant 0 : index
    %c0_4 = arith.constant 0 : index
    %3 = vector.load %arg3[%c0_3, %c0_4] : memref<1x256xf32, #tpu.memory_space<vmem>>, vector<1x256xf32>
    %4 = vector.broadcast %3 : vector<1x256xf32> to vector<16x256xf32>
    %5 = arith.addf %2, %4 : vector<16x256xf32>
    %cst_5 = arith.constant 0.000000e+00 : f32
    %6 = vector.broadcast %cst_5 : f32 to vector<16x256xf32>
    %7 = arith.maximumf %5, %6 : vector<16x256xf32>
    %8 = arith.truncf %7 : vector<16x256xf32> to vector<16x256xbf16>
    %c0_6 = arith.constant 0 : index
    %c0_7 = arith.constant 0 : index
    %9 = vector.load %arg4[%c0_6, %c0_7] : memref<256x256xbf16, #tpu.memory_space<vmem>>, vector<256x256xbf16>
    %cst_8 = arith.constant dense<0.000000e+00> : vector<16x256xf32>
    %10 = tpu.matmul %8, %9, %cst_8 {dimension_numbers = #tpu.dot_dimension_numbers<[1], [0], [0], [1], [0, 0, 1, 1], [], []>} : vector<16x256xbf16>, vector<256x256xbf16>, vector<16x256xf32> -> vector<16x256xf32>
    %c0_9 = arith.constant 0 : index
    %c0_10 = arith.constant 0 : index
    %11 = vector.load %arg5[%c0_9, %c0_10] : memref<1x256xf32, #tpu.memory_space<vmem>>, vector<1x256xf32>
    %12 = vector.broadcast %11 : vector<1x256xf32> to vector<16x256xf32>
    %13 = arith.addf %10, %12 : vector<16x256xf32>
    %cst_11 = arith.constant 0.000000e+00 : f32
    %14 = vector.broadcast %cst_11 : f32 to vector<16x256xf32>
    %15 = arith.maximumf %13, %14 : vector<16x256xf32>
    %16 = arith.truncf %15 : vector<16x256xf32> to vector<16x256xbf16>
    %c0_12 = arith.constant 0 : index
    %c0_13 = arith.constant 0 : index
    %17 = vector.load %arg6[%c0_12, %c0_13] : memref<256x8xbf16, #tpu.memory_space<vmem>>, vector<256x8xbf16>
    %cst_14 = arith.constant dense<0.000000e+00> : vector<16x8xf32>
    %18 = tpu.matmul %16, %17, %cst_14 {dimension_numbers = #tpu.dot_dimension_numbers<[1], [0], [0], [1], [0, 0, 1, 1], [], []>} : vector<16x256xbf16>, vector<256x8xbf16>, vector<16x8xf32> -> vector<16x8xf32>
    %c0_15 = arith.constant 0 : index
    %c0_16 = arith.constant 0 : index
    %19 = vector.load %arg7[%c0_15, %c0_16] : memref<1x8xf32, #tpu.memory_space<vmem>>, vector<1x8xf32>
    %20 = vector.broadcast %19 : vector<1x8xf32> to vector<16x8xf32>
    %21 = arith.addf %18, %20 : vector<16x8xf32>
    %22 = tpu.iota {dimensions = array<i32: 1>} : vector<1x8xi32>
    %c4_i32 = arith.constant 4 : i32
    %23 = vector.broadcast %c4_i32 : i32 to vector<1x8xi32>
    %24 = arith.cmpi sge, %22, %23 : vector<1x8xi32>
    %cst_17 = arith.constant -2.000000e+01 : f32
    %cst_18 = arith.constant 2.000000e+00 : f32
    %25 = vector.broadcast %cst_17 : f32 to vector<16x8xf32>
    %26 = arith.maximumf %25, %21 : vector<16x8xf32>
    %27 = vector.broadcast %cst_18 : f32 to vector<16x8xf32>
    %28 = arith.minimumf %27, %26 : vector<16x8xf32>
    %29 = math.exp %28 : vector<16x8xf32>
    %30 = vector.shape_cast %24 : vector<1x8xi1> to vector<1x8xi1>
    %31 = vector.broadcast %30 : vector<1x8xi1> to vector<16x8xi1>
    %32 = arith.select %31, %29, %21 : vector<16x8xi1>, vector<16x8xf32>
    %c0_19 = arith.constant 0 : index
    %c0_20 = arith.constant 0 : index
    %33 = vector.load %arg8[%c0_19, %c0_20] : memref<16x8xf32, #tpu.memory_space<vmem>>, vector<16x8xf32>
    tpu.vector_store %arg8[%c0_19, %c0_20], %32 {strides = array<i32>} : memref<16x8xf32, #tpu.memory_space<vmem>>, vector<16x8xf32>,
    return
  }
  func.func @transform_0(%arg0: i32) -> (i32, i32) {
    %c0_i32 = arith.constant 0 : i32
    %c0_i32_0 = arith.constant 0 : i32
    return %arg0, %c0_i32 : i32, i32
  }
  func.func @transform_1(%arg0: i32) -> (i32, i32) {
    %c0_i32 = arith.constant 0 : i32
    %c0_i32_0 = arith.constant 0 : i32
    %c0_i32_1 = arith.constant 0 : i32
    return %c0_i32, %c0_i32_0 : i32, i32
  }
  func.func @transform_2(%arg0: i32) -> (i32, i32) {
    %c0_i32 = arith.constant 0 : i32
    %c0_i32_0 = arith.constant 0 : i32
    %c0_i32_1 = arith.constant 0 : i32
    return %c0_i32, %c0_i32_0 : i32, i32
  }
  func.func @transform_3(%arg0: i32) -> (i32, i32) {
    %c0_i32 = arith.constant 0 : i32
    %c0_i32_0 = arith.constant 0 : i32
    %c0_i32_1 = arith.constant 0 : i32
    return %c0_i32, %c0_i32_0 : i32, i32
  }
  func.func @transform_4(%arg0: i32) -> (i32, i32) {
    %c0_i32 = arith.constant 0 : i32
    %c0_i32_0 = arith.constant 0 : i32
    %c0_i32_1 = arith.constant 0 : i32
    return %c0_i32, %c0_i32_0 : i32, i32
  }
  func.func @transform_5(%arg0: i32) -> (i32, i32) {
    %c0_i32 = arith.constant 0 : i32
    %c0_i32_0 = arith.constant 0 : i32
    %c0_i32_1 = arith.constant 0 : i32
    return %c0_i32, %c0_i32_0 : i32, i32
  }
  func.func @transform_6(%arg0: i32) -> (i32, i32) {
    %c0_i32 = arith.constant 0 : i32
    %c0_i32_0 = arith.constant 0 : i32
    %c0_i32_1 = arith.constant 0 : i32
    return %c0_i32, %c0_i32_0 : i32, i32
  }
  func.func @transform_7(%arg0: i32) -> (i32, i32) {
    %c0_i32 = arith.constant 0 : i32
    %c0_i32_0 = arith.constant 0 : i32
    return %arg0, %c0_i32 : i32, i32
  }
}

</mosaic_0001>

<llo_original>
// kernel: tpu_custom_call.1
$region0: #{tpu_custom_call.1}
  #allocation0 [shape = 'u32[]', space=smem, size = 0x4, offset = 0x4, fixed_abs, tag = 'smem constant byte address 0x4 - core index']
  #allocation1 [shape = 'u32[144,128]{1,0:T(1,128)}', space=vmem, size = 0x12000, scoped, tag = 'internal scratch']
  %s0 = inlined_call_operand.vmem [shape: bf16[16,16], index: 0, kind: input, shape index: {}]
  %s1 = inlined_call_operand.vmem [shape: bf16[16,256], index: 1, kind: input, shape index: {}]
  %s2 = inlined_call_operand.vmem [shape: f32[1,256], index: 2, kind: input, shape index: {}]
  %s3 = inlined_call_operand.hbm [shape: bf16[256,256], index: 3, kind: input, shape index: {}]
  %s4 = inlined_call_operand.vmem [shape: f32[1,256], index: 4, kind: input, shape index: {}]
  %s5 = inlined_call_operand.vmem [shape: bf16[256,8], index: 5, kind: input, shape index: {}]
  %s6 = inlined_call_operand.vmem [shape: f32[1,8], index: 6, kind: input, shape index: {}]
  %s7 = inlined_call_operand.vmem [shape: f32[16,8], index: 7, kind: output, shape index: {}]
  %s8 = sld [smem:[#allocation0]]
  $region42: #{tpu_custom_call.1} parent=0
    _
  %s10 = ssub.s32 1, %s8
  %s11 = scalar_select 0, %s10, %s8
  $region1: #{tpu_custom_call.1} parent=0
    #allocation2 [shape = 'u8[131072]{0}', space=vmem, size = 0x20000, scoped, tag = 'input window, operand 3, single buffered']
    #allocation3 [shape = 's32[1]{0}', space=sflag, size = 0x4, scoped, tag = 'scoped memory for tpu_custom_call.1']
    %12 = vsyncpa [#allocation3], 0
    // Predicated region
    $region2: #{tpu_custom_call.1} parent=1 // pred_check
      _
    $region3: #{tpu_custom_call.1} parent=1 // pred_check_branch
      %14 = sbr.rel (0) target = $region5
    $region4: #{tpu_custom_call.1} parent=1 // pred_region
      _
    $region5: #{tpu_custom_call.1} parent=1 // pred_fallthru
      _
    // Predicated region
    $region6: #{tpu_custom_call.1} parent=1 // pred_check
      _
    $region7: #{tpu_custom_call.1} parent=1 // pred_check_branch
      %16 = sbr.rel (0) target = $region9
    $region8: #{tpu_custom_call.1} parent=1 // pred_region
      _
    $region9: #{tpu_custom_call.1} parent=1 // pred_fallthru
      _
    // Predicated region
    $region10: #{tpu_custom_call.1} parent=1 // pred_check
      _
    $region11: #{tpu_custom_call.1} parent=1 // pred_check_branch
      %18 = sbr.rel (0) target = $region13
    $region12: #{tpu_custom_call.1} parent=1 // pred_region
      _
    $region13: #{tpu_custom_call.1} parent=1 // pred_fallthru
      _
    // Predicated region
    $region14: #{tpu_custom_call.1} parent=1 // pred_check
      _
    $region15: #{tpu_custom_call.1} parent=1 // pred_check_branch
      %20 = sbr.rel (0) target = $region17
    $region16: #{tpu_custom_call.1} parent=1 // pred_region
      %s22 = ssub.s32 4096, 4096
      %23 = vsyncadd [#allocation3], %s22
      %s24 = sshll.u32 [#allocation2], 4
      %s25 = int_to_ptr.vmem [resolvable:$true] %s24
      %30 = dma.hbm_to_vmem [thread:$0]  %s3, 4096, %s25, [#allocation3], 128, 128, 8
    $region17: #{tpu_custom_call.1} parent=1 // pred_fallthru
      _
    // Predicated region
    $region18: #{tpu_custom_call.1} parent=1 // pred_check
      _
    $region19: #{tpu_custom_call.1} parent=1 // pred_check_branch
      %32 = sbr.rel (0) target = $region21
    $region20: #{tpu_custom_call.1} parent=1 // pred_region
      _
    $region21: #{tpu_custom_call.1} parent=1 // pred_fallthru
      _
    // Predicated region
    $region22: #{tpu_custom_call.1} parent=1 // pred_check
      _
    $region23: #{tpu_custom_call.1} parent=1 // pred_check_branch
      %34 = sbr.rel (0) target = $region25
    $region24: #{tpu_custom_call.1} parent=1 // pred_region
      _
    $region25: #{tpu_custom_call.1} parent=1 // pred_fallthru
      _
    // Predicated region
    $region26: #{tpu_custom_call.1} parent=1 // pred_check
      _
    $region27: #{tpu_custom_call.1} parent=1 // pred_check_branch
      %36 = sbr.rel (0) target = $region29
    $region28: #{tpu_custom_call.1} parent=1 // pred_region
      _
    $region29: #{tpu_custom_call.1} parent=1 // pred_fallthru
      _
    // Predicated region
    $region30: #{tpu_custom_call.1} parent=1 // pred_check
      _
    $region31: #{tpu_custom_call.1} parent=1 // pred_check_branch
      %38 = sbr.rel (0) target = $region33
    $region32: #{tpu_custom_call.1} parent=1 // pred_region
      %39 = dma.done [#allocation3], 4096
    $region33: #{tpu_custom_call.1} parent=1 // pred_fallthru
      _
    %v41 = vld [vmem:[%s0] sm:$0xf]
    %v42 = vld [vmem:[%s0 + $0x4] sm:$0xf]
    %v43 = vld [vmem:[%s1] sm:$0xff]
    %v44 = vld [vmem:[%s1 + $0x8] sm:$0xff]
    %v45 = vld [vmem:[%s2] sm:$0x3]
    %v47 = vlaneseq
    %v48 = vshrl.u32 %v47, 7
    %v49 = vsub.s32 0, %v48
    %v50 = vrot.slane %v45, %v49
    %v51 = vlaneseq
    %v52 = vshrl.u32 %v51, 7
    %v53 = vsub.s32 1, %v52
    %v54 = vrot.slane %v45, %v53
    %v59 = vunpack.c.l.b16 %v41
    %v60 = vunpack.c.l.b16 %v42
    %v61 = vpack.c.b16 %v60, %v59
    %v64 = vunpack.c.l.b16 %v43
    %v65 = vunpack.c.h.b16 %v43
    %v66 = vunpack.c.l.b16 %v44
    %v67 = vunpack.c.h.b16 %v44
    %v68 = vpack.c.b16 %v66, %v64
    %v69 = vpack.c.b16 %v67, %v65
    %vm72 = vcmask 130048
    %v74 = vsel %vm72, %v61, 0
    %76 = vmatprep.subr.bf16.mxu0 %v69
    %77 = vmatpush1.bf16.msra.mxu0 %v68
    %78 = vmatprep.subr.bf16.mxu0 0
    %79 = vmatpush1.bf16.msra.mxu0 0
    %80 = vmatprep.subr.bf16.mxu0 0
    %81 = vmatpush1.bf16.msra.mxu0 0
    %82 = vmatprep.subr.bf16.mxu0 0
    %83 = vmatpush1.bf16.msra.mxu0 0
    %84 = vmatprep.subr.bf16.mxu0 0
    %85 = vmatpush1.bf16.msra.mxu0 0
    %86 = vmatprep.subr.bf16.mxu0 0
    %87 = vmatpush1.bf16.msra.mxu0 0
    %88 = vmatprep.subr.bf16.mxu0 0
    %89 = vmatpush1.bf16.msra.mxu0 0
    %90 = vmatprep.subr.bf16.mxu0 0
    %91 = vmatpush1.bf16.msra.mxu0 0
    %92 = vmatprep.subr.bf16.mxu0 0
    %93 = vmatpush1.bf16.msra.mxu0 0
    %94 = vmatprep.subr.bf16.mxu0 0
    %95 = vmatpush1.bf16.msra.mxu0 0
    %96 = vmatprep.subr.bf16.mxu0 0
    %97 = vmatpush1.bf16.msra.mxu0 0
    %98 = vmatprep.subr.bf16.mxu0 0
    %99 = vmatpush1.bf16.msra.mxu0 0
    %100 = vmatprep.subr.bf16.mxu0 0
    %101 = vmatpush1.bf16.msra.mxu0 0
    %102 = vmatprep.subr.bf16.mxu0 0
    %103 = vmatpush1.bf16.msra.mxu0 0
    %104 = vmatprep.subr.bf16.mxu0 0
    %105 = vmatpush1.bf16.msra.mxu0 0
    %106 = vmatprep.subr.bf16.mxu0 0
    %107 = vmatpush1.bf16.msra.mxu0 0
    %108 = vmatprep.mubr.bf16.mxu0 0
    %109 = vmatmul.mubr.bf16.gmra.mrb[0].mxu0 %v74
    %v110 = vpop.f32.mrb[0].mxu0
    %v111 = vadd.f32 %v50, %v110
    %v112 = vpop.f32.mrb[0].mxu0
    %v113 = vadd.f32 %v54, %v112
    %v114 = vpop.f32.mrb[0].mxu0
    %v115 = vadd.f32 %v50, %v114
    %v116 = vpop.f32.mrb[0].mxu0
    %v117 = vadd.f32 %v54, %v116
    %118 = vdwg.mxu0
    %v119 = vmax.f32 %v111, 0.0
    %v120 = vmax.f32 %v113, 0.0
    %v121 = vmax.f32 %v115, 0.0
    %v122 = vmax.f32 %v117, 0.0
    %v123 = vpack.c.bf16 %v121, %v119
    %v124 = vpack.c.bf16 %v122, %v120
    %v125 = vld [vmem:[#allocation2] sm:$0xff]
    %v126 = vld [vmem:[#allocation2 + $0x8] sm:$0xff]
    %v127 = vld [vmem:[#allocation2 + $0x10] sm:$0xff]
    %v128 = vld [vmem:[#allocation2 + $0x18] sm:$0xff]
    %v129 = vld [vmem:[#allocation2 + $0x20] sm:$0xff]
    %v130 = vld [vmem:[#allocation2 + $0x28] sm:$0xff]
    %v131 = vld [vmem:[#allocation2 + $0x30] sm:$0xff]
    %v132 = vld [vmem:[#allocation2 + $0x38] sm:$0xff]
    %v133 = vld [vmem:[#allocation2 + $0x40] sm:$0xff]
    %v134 = vld [vmem:[#allocation2 + $0x48] sm:$0xff]
    %v135 = vld [vmem:[#allocation2 + $0x50] sm:$0xff]
    %v136 = vld [vmem:[#allocation2 + $0x58] sm:$0xff]
    %v137 = vld [vmem:[#allocation2 + $0x60] sm:$0xff]
    %v138 = vld [vmem:[#allocation2 + $0x68] sm:$0xff]
    %v139 = vld [vmem:[#allocation2 + $0x70] sm:$0xff]
    %v140 = vld [vmem:[#allocation2 + $0x78] sm:$0xff]
    %v141 = vld [vmem:[#allocation2 + $0x80] sm:$0xff]
    %v142 = vld [vmem:[#allocation2 + $0x88] sm:$0xff]
    %v143 = vld [vmem:[#allocation2 + $0x90] sm:$0xff]
    %v144 = vld [vmem:[#allocation2 + $0x98] sm:$0xff]
    %v145 = vld [vmem:[#allocation2 + $0xa0] sm:$0xff]
    %v146 = vld [vmem:[#allocation2 + $0xa8] sm:$0xff]
    %v147 = vld [vmem:[#allocation2 + $0xb0] sm:$0xff]
    %v148 = vld [vmem:[#allocation2 + $0xb8] sm:$0xff]
    %v149 = vld [vmem:[#allocation2 + $0xc0] sm:$0xff]
    %v150 = vld [vmem:[#allocation2 + $0xc8] sm:$0xff]
    %v151 = vld [vmem:[#allocation2 + $0xd0] sm:$0xff]
    %v152 = vld [vmem:[#allocation2 + $0xd8] sm:$0xff]
    %v153 = vld [vmem:[#allocation2 + $0xe0] sm:$0xff]
    %v154 = vld [vmem:[#allocation2 + $0xe8] sm:$0xff]
    %v155 = vld [vmem:[#allocation2 + $0xf0] sm:$0xff]
    %v156 = vld [vmem:[#allocation2 + $0xf8] sm:$0xff]
    %v157 = vld [vmem:[%s4] sm:$0x3]
    %v159 = vlaneseq
    %v160 = vshrl.u32 %v159, 7
    %v161 = vsub.s32 0, %v160
    %v162 = vrot.slane %v157, %v161
    %v163 = vlaneseq
    %v164 = vshrl.u32 %v163, 7
    %v165 = vsub.s32 1, %v164
    %v166 = vrot.slane %v157, %v165
    %v201 = vunpack.c.l.b16 %v125
    %v202 = vunpack.c.h.b16 %v125
    %v203 = vunpack.c.l.b16 %v126
    %v204 = vunpack.c.h.b16 %v126
    %v205 = vunpack.c.l.b16 %v127
    %v206 = vunpack.c.h.b16 %v127
    %v207 = vunpack.c.l.b16 %v128
    %v208 = vunpack.c.h.b16 %v128
    %v209 = vunpack.c.l.b16 %v129
    %v210 = vunpack.c.h.b16 %v129
    %v211 = vunpack.c.l.b16 %v130
    %v212 = vunpack.c.h.b16 %v130
    %v213 = vunpack.c.l.b16 %v131
    %v214 = vunpack.c.h.b16 %v131
    %v215 = vunpack.c.l.b16 %v132
    %v216 = vunpack.c.h.b16 %v132
    %v217 = vunpack.c.l.b16 %v133
    %v218 = vunpack.c.h.b16 %v133
    %v219 = vunpack.c.l.b16 %v134
    %v220 = vunpack.c.h.b16 %v134
    %v221 = vunpack.c.l.b16 %v135
    %v222 = vunpack.c.h.b16 %v135
    %v223 = vunpack.c.l.b16 %v136
    %v224 = vunpack.c.h.b16 %v136
    %v225 = vunpack.c.l.b16 %v137
    %v226 = vunpack.c.h.b16 %v137
    %v227 = vunpack.c.l.b16 %v138
    %v228 = vunpack.c.h.b16 %v138
    %v229 = vunpack.c.l.b16 %v139
    %v230 = vunpack.c.h.b16 %v139
    %v231 = vunpack.c.l.b16 %v140
    %v232 = vunpack.c.h.b16 %v140
    %v233 = vunpack.c.l.b16 %v141
    %v234 = vunpack.c.h.b16 %v141
    %v235 = vunpack.c.l.b16 %v142
    %v236 = vunpack.c.h.b16 %v142
    %v237 = vunpack.c.l.b16 %v143
    %v238 = vunpack.c.h.b16 %v143
    %v239 = vunpack.c.l.b16 %v144
    %v240 = vunpack.c.h.b16 %v144
    %v241 = vunpack.c.l.b16 %v145
    %v242 = vunpack.c.h.b16 %v145
    %v243 = vunpack.c.l.b16 %v146
    %v244 = vunpack.c.h.b16 %v146
    %v245 = vunpack.c.l.b16 %v147
    %v246 = vunpack.c.h.b16 %v147
    %v247 = vunpack.c.l.b16 %v148
    %v248 = vunpack.c.h.b16 %v148
    %v249 = vunpack.c.l.b16 %v149
    %v250 = vunpack.c.h.b16 %v149
    %v251 = vunpack.c.l.b16 %v150
    %v252 = vunpack.c.h.b16 %v150
    %v253 = vunpack.c.l.b16 %v151
    %v254 = vunpack.c.h.b16 %v151
    %v255 = vunpack.c.l.b16 %v152
    %v256 = vunpack.c.h.b16 %v152
    %v257 = vunpack.c.l.b16 %v153
    %v258 = vunpack.c.h.b16 %v153
    %v259 = vunpack.c.l.b16 %v154
    %v260 = vunpack.c.h.b16 %v154
    %v261 = vunpack.c.l.b16 %v155
    %v262 = vunpack.c.h.b16 %v155
    %v263 = vunpack.c.l.b16 %v156
    %v264 = vunpack.c.h.b16 %v156
    %v265 = vpack.c.b16 %v203, %v201
    %v266 = vpack.c.b16 %v204, %v202
    %v267 = vpack.c.b16 %v207, %v205
    %v268 = vpack.c.b16 %v208, %v206
    %v269 = vpack.c.b16 %v211, %v209
    %v270 = vpack.c.b16 %v212, %v210
    %v271 = vpack.c.b16 %v215, %v213
    %v272 = vpack.c.b16 %v216, %v214
    %v273 = vpack.c.b16 %v219, %v217
    %v274 = vpack.c.b16 %v220, %v218
    %v275 = vpack.c.b16 %v223, %v221
    %v276 = vpack.c.b16 %v224, %v222
    %v277 = vpack.c.b16 %v227, %v225
    %v278 = vpack.c.b16 %v228, %v226
    %v279 = vpack.c.b16 %v231, %v229
    %v280 = vpack.c.b16 %v232, %v230
    %v281 = vpack.c.b16 %v235, %v233
    %v282 = vpack.c.b16 %v236, %v234
    %v283 = vpack.c.b16 %v239, %v237
    %v284 = vpack.c.b16 %v240, %v238
    %v285 = vpack.c.b16 %v243, %v241
    %v286 = vpack.c.b16 %v244, %v242
    %v287 = vpack.c.b16 %v247, %v245
    %v288 = vpack.c.b16 %v248, %v246
    %v289 = vpack.c.b16 %v251, %v249
    %v290 = vpack.c.b16 %v252, %v250
    %v291 = vpack.c.b16 %v255, %v253
    %v292 = vpack.c.b16 %v256, %v254
    %v293 = vpack.c.b16 %v259, %v257
    %v294 = vpack.c.b16 %v260, %v258
    %v295 = vpack.c.b16 %v263, %v261
    %v296 = vpack.c.b16 %v264, %v262
    %329 = vmatprep.subr.bf16.mxu0 %v266
    %330 = vmatpush1.bf16.msra.mxu0 %v265
    %331 = vmatprep.subr.bf16.mxu0 %v268
    %332 = vmatpush1.bf16.msra.mxu0 %v267
    %333 = vmatprep.subr.bf16.mxu0 %v270
    %334 = vmatpush1.bf16.msra.mxu0 %v269
    %335 = vmatprep.subr.bf16.mxu0 %v272
    %336 = vmatpush1.bf16.msra.mxu0 %v271
    %337 = vmatprep.subr.bf16.mxu0 %v274
    %338 = vmatpush1.bf16.msra.mxu0 %v273
    %339 = vmatprep.subr.bf16.mxu0 %v276
    %340 = vmatpush1.bf16.msra.mxu0 %v275
    %341 = vmatprep.subr.bf16.mxu0 %v278
    %342 = vmatpush1.bf16.msra.mxu0 %v277
    %343 = vmatprep.subr.bf16.mxu0 %v280
    %344 = vmatpush1.bf16.msra.mxu0 %v279
    %345 = vmatprep.subr.bf16.mxu0 %v282
    %346 = vmatpush1.bf16.msra.mxu0 %v281
    %347 = vmatprep.subr.bf16.mxu0 %v284
    %348 = vmatpush1.bf16.msra.mxu0 %v283
    %349 = vmatprep.subr.bf16.mxu0 %v286
    %350 = vmatpush1.bf16.msra.mxu0 %v285
    %351 = vmatprep.subr.bf16.mxu0 %v288
    %352 = vmatpush1.bf16.msra.mxu0 %v287
    %353 = vmatprep.subr.bf16.mxu0 %v290
    %354 = vmatpush1.bf16.msra.mxu0 %v289
    %355 = vmatprep.subr.bf16.mxu0 %v292
    %356 = vmatpush1.bf16.msra.mxu0 %v291
    %357 = vmatprep.subr.bf16.mxu0 %v294
    %358 = vmatpush1.bf16.msra.mxu0 %v293
    %359 = vmatprep.subr.bf16.mxu0 %v296
    %360 = vmatpush1.bf16.msra.mxu0 %v295
    %361 = vmatprep.mubr.bf16.mxu0 %v124
    %362 = vmatmul.mubr.bf16.gmra.mrb[0].mxu0 %v123
    %v363 = vpop.f32.mrb[0].mxu0
    %v364 = vadd.f32 %v162, %v363
    %v365 = vpop.f32.mrb[0].mxu0
    %v366 = vadd.f32 %v166, %v365
    %v367 = vpop.f32.mrb[0].mxu0
    %v368 = vadd.f32 %v162, %v367
    %v369 = vpop.f32.mrb[0].mxu0
    %v370 = vadd.f32 %v166, %v369
    %371 = vdwg.mxu0
    %v372 = vmax.f32 %v364, 0.0
    %v373 = vmax.f32 %v366, 0.0
    %v374 = vmax.f32 %v368, 0.0
    %v375 = vmax.f32 %v370, 0.0
    %v376 = vpack.c.bf16 %v374, %v372
    %v377 = vpack.c.bf16 %v375, %v373
    %v378 = vld [vmem:[%s5] sm:$0xf]
    %v379 = vld [vmem:[%s5 + $0x4] sm:$0xf]
    %v380 = vld [vmem:[%s5 + $0x8] sm:$0xf]
    %v381 = vld [vmem:[%s5 + $0xc] sm:$0xf]
    %v382 = vld [vmem:[%s5 + $0x10] sm:$0xf]
    %v383 = vld [vmem:[%s5 + $0x14] sm:$0xf]
    %v384 = vld [vmem:[%s5 + $0x18] sm:$0xf]
    %v385 = vld [vmem:[%s5 + $0x1c] sm:$0xf]
    %v386 = vld [vmem:[%s5 + $0x20] sm:$0xf]
    %v387 = vld [vmem:[%s5 + $0x24] sm:$0xf]
    %v388 = vld [vmem:[%s5 + $0x28] sm:$0xf]
    %v389 = vld [vmem:[%s5 + $0x2c] sm:$0xf]
    %v390 = vld [vmem:[%s5 + $0x30] sm:$0xf]
    %v391 = vld [vmem:[%s5 + $0x34] sm:$0xf]
    %v392 = vld [vmem:[%s5 + $0x38] sm:$0xf]
    %v393 = vld [vmem:[%s5 + $0x3c] sm:$0xf]
    %v394 = vld [vmem:[%s5 + $0x40] sm:$0xf]
    %v395 = vld [vmem:[%s5 + $0x44] sm:$0xf]
    %v396 = vld [vmem:[%s5 + $0x48] sm:$0xf]
    %v397 = vld [vmem:[%s5 + $0x4c] sm:$0xf]
    %v398 = vld [vmem:[%s5 + $0x50] sm:$0xf]
    %v399 = vld [vmem:[%s5 + $0x54] sm:$0xf]
    %v400 = vld [vmem:[%s5 + $0x58] sm:$0xf]
    %v401 = vld [vmem:[%s5 + $0x5c] sm:$0xf]
    %v402 = vld [vmem:[%s5 + $0x60] sm:$0xf]
    %v403 = vld [vmem:[%s5 + $0x64] sm:$0xf]
    %v404 = vld [vmem:[%s5 + $0x68] sm:$0xf]
    %v405 = vld [vmem:[%s5 + $0x6c] sm:$0xf]
    %v406 = vld [vmem:[%s5 + $0x70] sm:$0xf]
    %v407 = vld [vmem:[%s5 + $0x74] sm:$0xf]
    %v408 = vld [vmem:[%s5 + $0x78] sm:$0xf]
    %v409 = vld [vmem:[%s5 + $0x7c] sm:$0xf]
    %v410 = vld [vmem:[%s6] sm:$0x1]
    %v412 = vlaneseq
    %v413 = vshrl.u32 %v412, 7
    %v414 = vsub.s32 0, %v413
    %v415 = vrot.slane %v410, %v414
    %v449 = vunpack.c.l.b16 %v378
    %v450 = vunpack.c.l.b16 %v379
    %v451 = vunpack.c.l.b16 %v380
    %v452 = vunpack.c.l.b16 %v381
    %v453 = vunpack.c.l.b16 %v382
    %v454 = vunpack.c.l.b16 %v383
    %v455 = vunpack.c.l.b16 %v384
    %v456 = vunpack.c.l.b16 %v385
    %v457 = vunpack.c.l.b16 %v386
    %v458 = vunpack.c.l.b16 %v387
    %v459 = vunpack.c.l.b16 %v388
    %v460 = vunpack.c.l.b16 %v389
    %v461 = vunpack.c.l.b16 %v390
    %v462 = vunpack.c.l.b16 %v391
    %v463 = vunpack.c.l.b16 %v392
    %v464 = vunpack.c.l.b16 %v393
    %v465 = vunpack.c.l.b16 %v394
    %v466 = vunpack.c.l.b16 %v395
    %v467 = vunpack.c.l.b16 %v396
    %v468 = vunpack.c.l.b16 %v397
    %v469 = vunpack.c.l.b16 %v398
    %v470 = vunpack.c.l.b16 %v399
    %v471 = vunpack.c.l.b16 %v400
    %v472 = vunpack.c.l.b16 %v401
    %v473 = vunpack.c.l.b16 %v402
    %v474 = vunpack.c.l.b16 %v403
    %v475 = vunpack.c.l.b16 %v404
    %v476 = vunpack.c.l.b16 %v405
    %v477 = vunpack.c.l.b16 %v406
    %v478 = vunpack.c.l.b16 %v407
    %v479 = vunpack.c.l.b16 %v408
    %v480 = vunpack.c.l.b16 %v409
    %v481 = vpack.c.b16 %v450, %v449
    %v482 = vpack.c.b16 %v452, %v451
    %v483 = vpack.c.b16 %v454, %v453
    %v484 = vpack.c.b16 %v456, %v455
    %v485 = vpack.c.b16 %v458, %v457
    %v486 = vpack.c.b16 %v460, %v459
    %v487 = vpack.c.b16 %v462, %v461
    %v488 = vpack.c.b16 %v464, %v463
    %v489 = vpack.c.b16 %v466, %v465
    %v490 = vpack.c.b16 %v468, %v467
    %v491 = vpack.c.b16 %v470, %v469
    %v492 = vpack.c.b16 %v472, %v471
    %v493 = vpack.c.b16 %v474, %v473
    %v494 = vpack.c.b16 %v476, %v475
    %v495 = vpack.c.b16 %v478, %v477
    %v496 = vpack.c.b16 %v480, %v479
    %513 = vmatprep.subr.bf16.mxu0 0
    %514 = vmatpush1.bf16.msra.mxu0 %v481
    %515 = vmatprep.subr.bf16.mxu0 0
    %516 = vmatpush1.bf16.msra.mxu0 %v482
    %517 = vmatprep.subr.bf16.mxu0 0
    %518 = vmatpush1.bf16.msra.mxu0 %v483
    %519 = vmatprep.subr.bf16.mxu0 0
    %520 = vmatpush1.bf16.msra.mxu0 %v484
    %521 = vmatprep.subr.bf16.mxu0 0
    %522 = vmatpush1.bf16.msra.mxu0 %v485
    %523 = vmatprep.subr.bf16.mxu0 0
    %524 = vmatpush1.bf16.msra.mxu0 %v486
    %525 = vmatprep.subr.bf16.mxu0 0
    %526 = vmatpush1.bf16.msra.mxu0 %v487
    %527 = vmatprep.subr.bf16.mxu0 0
    %528 = vmatpush1.bf16.msra.mxu0 %v488
    %529 = vmatprep.subr.bf16.mxu0 0
    %530 = vmatpush1.bf16.msra.mxu0 %v489
    %531 = vmatprep.subr.bf16.mxu0 0
    %532 = vmatpush1.bf16.msra.mxu0 %v490
    %533 = vmatprep.subr.bf16.mxu0 0
    %534 = vmatpush1.bf16.msra.mxu0 %v491
    %535 = vmatprep.subr.bf16.mxu0 0
    %536 = vmatpush1.bf16.msra.mxu0 %v492
    %537 = vmatprep.subr.bf16.mxu0 0
    %538 = vmatpush1.bf16.msra.mxu0 %v493
    %539 = vmatprep.subr.bf16.mxu0 0
    %540 = vmatpush1.bf16.msra.mxu0 %v494
    %541 = vmatprep.subr.bf16.mxu0 0
    %542 = vmatpush1.bf16.msra.mxu0 %v495
    %543 = vmatprep.subr.bf16.mxu0 0
    %544 = vmatpush1.bf16.msra.mxu0 %v496
    %545 = vmatprep.mubr.bf16.mxu0 %v377
    %546 = vmatmul.mubr.bf16.gmra.mrb[0].mxu0 %v376
    %v547 = vpop.f32.mrb[0].mxu0
    %v548 = vadd.f32 %v415, %v547
    %v549 = vpop.f32.mrb[0].mxu0
    %v550 = vpop.f32.mrb[0].mxu0
    %v551 = vadd.f32 %v415, %v550
    %v552 = vpop.f32.mrb[0].mxu0
    %553 = vdwg.mxu0
    %v554 = vlaneseq
    %v555 = vand.u32 %v554, 127
    %vm556 = vcmp.ge.s32.totalorder %v555, 4
    %v557 = vmax.f32 %v548, -20.0
    %v558 = vmax.f32 %v551, -20.0
    %v559 = vmin.f32 %v557, 2.0
    %v560 = vmin.f32 %v558, 2.0
    %v561 = vmul.f32 %v559, 1.442695
    %v562 = vpow.pop %v561
    %v563 = vmul.f32 %v560, 1.442695
    %v564 = vpow.pop %v563
    %v565 = vsel %vm556, 1, 0
    %vm566 = vcmp.eq.s32.totalorder %v565, 1
    %v567 = vsel %vm566, %v562, %v548
    %v568 = vsel %vm566, %v564, %v551
    %vm569 = vcmask 64512
    %570 = vst.msk [vmem:[%s7] sm:$0xff] %vm569, %v567
    %571 = vst.msk [vmem:[%s7 + $0x8] sm:$0xff] %vm569, %v568
    // Predicated region
    $region34: #{tpu_custom_call.1} parent=1 // pred_check
      _
    $region35: #{tpu_custom_call.1} parent=1 // pred_check_branch
      %573 = sbr.rel (0) target = $region37
    $region36: #{tpu_custom_call.1} parent=1 // pred_region
      _
    $region37: #{tpu_custom_call.1} parent=1 // pred_fallthru
      _
    // Predicated region
    $region38: #{tpu_custom_call.1} parent=1 // pred_check
      _
    $region39: #{tpu_custom_call.1} parent=1 // pred_check_branch
      %575 = sbr.rel (0) target = $region41
    $region40: #{tpu_custom_call.1} parent=1 // pred_region
      _
    $region41: #{tpu_custom_call.1} parent=1 // pred_fallthru
      _
    %576 = vsyncpa [#allocation3], 1

</llo_original>
